<compile_context>
chip_gen: v5e
topology: v5e:2x2
jax: 0.10.0
libtpu: 0.0.40
codegen_flags: <defaults>
</compile_context>

<pallas_src>
import functools

import jax
import jax.numpy as jnp
from jax import lax
from jax.experimental import pallas as pl
from jax.experimental.pallas import tpu as pltpu

_LANE = 128
_TARGET_BLOCK_BYTES = 2 * 1024 * 1024  # ~2 MiB of input per grid step
_ON_TPU = jax.default_backend() == "tpu"


# --------------------------------------------------------------------------
# Kernels
# --------------------------------------------------------------------------
def _gn_kernel_hw(seed_ref, x_ref, o_ref, *, sigma):
    """TPU hardware-PRNG path (Mosaic only)."""
    tile = pl.program_id(0)
    # Two seed words (user seed, tile id) -> no linear (seed, tile) collisions.
    pltpu.prng_seed(seed_ref[0], tile)
    if hasattr(pltpu, "stateful_normal"):
        z = pltpu.stateful_normal(x_ref.shape, jnp.float32)
    else:
        # Fallback for older jax: raw bits -> uniform -> inverse CDF.
        bits = pltpu.bitcast(pltpu.prng_random_bits(x_ref.shape), jnp.int32)
        frac = (bits & jnp.int32(0x00FFFFFF)).astype(jnp.float32)       # [0, 2^24)
        u = (frac + jnp.float32(0.5)) * jnp.float32(2.0 / (1 << 24)) - jnp.float32(1.0)
        z = jnp.float32(1.4142135623730951) * lax.erf_inv(u)            # (-1, 1) -> N(0,1)
    x = x_ref[...].astype(jnp.float32)
    o_ref[...] = (x + jnp.float32(sigma) * z).astype(o_ref.dtype)


def _mix32(h):
    """splitmix32-style finalizer on uint32."""
    h = h ^ (h >> jnp.uint32(16))
    h = h * jnp.uint32(0x7FEB352D)
    h = h ^ (h >> jnp.uint32(15))
    h = h * jnp.uint32(0x846CA68B)
    h = h ^ (h >> jnp.uint32(16))
    return h


def _gn_kernel_portable(seed_ref, x_ref, o_ref, *, sigma):
    """Backend-agnostic path: counter-hash PRNG + Box-Muller, plain jnp/lax ops."""
    shape = x_ref.shape
    tile = pl.program_id(0).astype(jnp.uint32)
    seed = seed_ref[0].astype(jnp.uint32)
    row = lax.broadcasted_iota(jnp.uint32, shape, 0)
    col = lax.broadcasted_iota(jnp.uint32, shape, 1)
    ctr = (seed * jnp.uint32(0x9E3779B9)
           ^ tile * jnp.uint32(0x85EBCA6B)
           ^ row * jnp.uint32(0xC2B2AE35)
           ^ col * jnp.uint32(0x27D4EB2F))
    b1 = _mix32(ctr ^ jnp.uint32(0x68BC21EB))
    b2 = _mix32(ctr ^ jnp.uint32(0x02E5BE93))
    inv24 = jnp.float32(1.0 / (1 << 24))
    u1 = ((b1 >> jnp.uint32(8)).astype(jnp.float32) + jnp.float32(0.5)) * inv24  # (0, 1)
    u2 = (b2 >> jnp.uint32(8)).astype(jnp.float32) * inv24                        # [0, 1)
    z = jnp.sqrt(jnp.float32(-2.0) * jnp.log(u1)) * jnp.cos(jnp.float32(6.283185307179586) * u2)
    x = x_ref[...].astype(jnp.float32)
    o_ref[...] = (x + jnp.float32(sigma) * z).astype(o_ref.dtype)


# --------------------------------------------------------------------------
# Wrapper
# --------------------------------------------------------------------------
def _round_up(v, m):
    return -(-v // m) * m


def _choose_block_rows(n_rows, itemsize):
    # Native sublane multiple so packed dtypes stay on full unmasked vregs:
    # 8 for f32, 16 for bf16, 32 for int8/fp8.
    sub = max(8, 32 // max(1, itemsize))
    # ~2 MiB of input per grid step (rounded to a multiple of 32 rows).
    target = max(32, (_TARGET_BLOCK_BYTES // (_LANE * itemsize)) // 32 * 32)
    # Keep >=2 grid steps when possible so the "parallel" axis can be split
    # across v7x's two TensorCores (neutral on v5e/v6e).
    cap = _round_up(max(1, -(-n_rows // 2)), sub)
    return max(sub, min(target, cap))


@functools.partial(jax.jit, static_argnames=("sigma",))
def gaussian_noise_pallas(x, seed, *, sigma):
    """out = x + sigma * N(0, 1), noise drawn inside the kernel."""
    orig_shape = x.shape
    orig_dtype = x.dtype
    total = x.size
    itemsize = jnp.dtype(orig_dtype).itemsize

    # Lane-dense slab: pad (if at all) only to a 128-lane multiple.  No
    # pad-to-block-multiple copy; Pallas masks the ragged last block.
    n_rows = -(-total // _LANE)
    pad = n_rows * _LANE - total
    xf = x.reshape(-1)
    if pad:
        xf = jnp.pad(xf, (0, pad))
    x2 = xf.reshape(n_rows, _LANE)

    block_rows = _choose_block_rows(n_rows, itemsize)
    grid = (-(-n_rows // block_rows),)

    kern = _gn_kernel_hw if _ON_TPU else _gn_kernel_portable
    seed_arr = jnp.asarray(seed, dtype=jnp.int32).reshape((1,))

    # TODO(synk): expose input_output_aliases={1: 0} once callers can donate x
    # (without donation XLA would insert an extra defensive copy).
    out2 = pl.pallas_call(
        functools.partial(kern, sigma=float(sigma)),
        out_shape=jax.ShapeDtypeStruct((n_rows, _LANE), orig_dtype),
        grid_spec=pltpu.PrefetchScalarGridSpec(
            num_scalar_prefetch=1,
            grid=grid,
            in_specs=[pl.BlockSpec((block_rows, _LANE), lambda i, s: (i, 0))],
            out_specs=pl.BlockSpec((block_rows, _LANE), lambda i, s: (i, 0)),
        ),
        compiler_params=pltpu.CompilerParams(
            dimension_semantics=("parallel",),
        ),
    )(seed_arr, x2)

    out = out2.reshape(-1)
    if pad:
        out = out[:total]
    return out.reshape(orig_shape)


class GaussianNoisePallas:
    """JAX/Pallas equivalent of the PyTorch GaussianNoise module."""

    def __init__(self, sigma):
        self.sigma = float(sigma)

    def __call__(self, x, seed):
        # TODO(synk): RNG stream differs from torch.randn_like (distribution is
        # identical: i.i.d. N(0, 1) scaled by sigma).
        return gaussian_noise_pallas(x, seed, sigma=self.sigma)


if __name__ == "__main__":
    key = jax.random.PRNGKey(0)
    x = jax.random.normal(key, (2, 4, 16, 16), dtype=jnp.float32)
    sigma = 0.1

    module = GaussianNoisePallas(sigma)
    out = jax.block_until_ready(module(x, seed=42))
    assert out.shape == x.shape and out.dtype == x.dtype

    # sigma = 0 -> exact identity (checks the data path / tiling / layout)
    ident = jax.block_until_ready(GaussianNoisePallas(0.0)(x, seed=7))
    assert jnp.array_equal(ident, x)

    # deterministic for a given seed, different for a different seed
    out_same = jax.block_until_ready(module(x, seed=42))
    out_diff = jax.block_until_ready(module(x, seed=43))
    assert jnp.array_equal(out, out_same)
    assert not jnp.array_equal(out, out_diff)

    # noise statistics: (out - x) / sigma should be ~N(0, 1) over 2048 samples
    noise = (out - x) / sigma
    assert abs(float(noise.mean())) < 0.2, float(noise.mean())
    assert abs(float(noise.std()) - 1.0) < 0.2, float(noise.std())

    print("KERNEL_OK")
</pallas_src>

<mosaic_0001>
module attributes {stable_mosaic.version = 11 : i64} {
  func.func @_gn_kernel_portable(%arg0: i32, %arg1: memref<1xi32, #tpu.memory_space<smem>>, %arg2: memref<8x128xf32, #tpu.memory_space<vmem>>, %arg3: memref<8x128xf32, #tpu.memory_space<vmem>>) attributes {dimension_semantics = [#tpu.dimension_semantics<parallel>], iteration_bounds = array<i64: 2>, scalar_prefetch = 1 : i64, scratch_operands = 0 : i64, tpu.core_type = #tpu.core_type<tc>, window_params = [{transform_indices = @transform_0, window_bounds = array<i64: 8, 128>}, {transform_indices = @transform_1, window_bounds = array<i64: 8, 128>}]} {
    %c0 = arith.constant 0 : index
    %0 = memref.load %arg1[%c0] : memref<1xi32, #tpu.memory_space<smem>>
    %1 = tpu.iota {dimensions = array<i32: 0>} : vector<8x128xi32>
    %2 = tpu.iota {dimensions = array<i32: 1>} : vector<8x128xi32>
    %c-1640531527_i32 = arith.constant -1640531527 : i32
    %3 = arith.muli %0, %c-1640531527_i32 : i32
    %c-2048144789_i32 = arith.constant -2048144789 : i32
    %4 = arith.muli %arg0, %c-2048144789_i32 : i32
    %5 = arith.xori %3, %4 : i32
    %c-1028477387_i32 = arith.constant -1028477387 : i32
    %6 = vector.broadcast %c-1028477387_i32 : i32 to vector<8x128xi32>
    %7 = arith.muli %1, %6 : vector<8x128xi32>
    %8 = vector.broadcast %5 : i32 to vector<8x128xi32>
    %9 = arith.xori %8, %7 : vector<8x128xi32>
    %c668265263_i32 = arith.constant 668265263 : i32
    %10 = vector.broadcast %c668265263_i32 : i32 to vector<8x128xi32>
    %11 = arith.muli %2, %10 : vector<8x128xi32>
    %12 = arith.xori %9, %11 : vector<8x128xi32>
    %c1757159915_i32 = arith.constant 1757159915 : i32
    %13 = vector.broadcast %c1757159915_i32 : i32 to vector<8x128xi32>
    %14 = arith.xori %12, %13 : vector<8x128xi32>
    %c16_i32 = arith.constant 16 : i32
    %15 = vector.broadcast %c16_i32 : i32 to vector<8x128xi32>
    %16 = arith.shrui %14, %15 : vector<8x128xi32>
    %17 = arith.xori %14, %16 : vector<8x128xi32>
    %c2146121005_i32 = arith.constant 2146121005 : i32
    %18 = vector.broadcast %c2146121005_i32 : i32 to vector<8x128xi32>
    %19 = arith.muli %17, %18 : vector<8x128xi32>
    %c15_i32 = arith.constant 15 : i32
    %20 = vector.broadcast %c15_i32 : i32 to vector<8x128xi32>
    %21 = arith.shrui %19, %20 : vector<8x128xi32>
    %22 = arith.xori %19, %21 : vector<8x128xi32>
    %c-2073254261_i32 = arith.constant -2073254261 : i32
    %23 = vector.broadcast %c-2073254261_i32 : i32 to vector<8x128xi32>
    %24 = arith.muli %22, %23 : vector<8x128xi32>
    %c16_i32_0 = arith.constant 16 : i32
    %25 = vector.broadcast %c16_i32_0 : i32 to vector<8x128xi32>
    %26 = arith.shrui %24, %25 : vector<8x128xi32>
    %27 = arith.xori %24, %26 : vector<8x128xi32>
    %c48610963_i32 = arith.constant 48610963 : i32
    %28 = vector.broadcast %c48610963_i32 : i32 to vector<8x128xi32>
    %29 = arith.xori %12, %28 : vector<8x128xi32>
    %c16_i32_1 = arith.constant 16 : i32
    %30 = vector.broadcast %c16_i32_1 : i32 to vector<8x128xi32>
    %31 = arith.shrui %29, %30 : vector<8x128xi32>
    %32 = arith.xori %29, %31 : vector<8x128xi32>
    %c2146121005_i32_2 = arith.constant 2146121005 : i32
    %33 = vector.broadcast %c2146121005_i32_2 : i32 to vector<8x128xi32>
    %34 = arith.muli %32, %33 : vector<8x128xi32>
    %c15_i32_3 = arith.constant 15 : i32
    %35 = vector.broadcast %c15_i32_3 : i32 to vector<8x128xi32>
    %36 = arith.shrui %34, %35 : vector<8x128xi32>
    %37 = arith.xori %34, %36 : vector<8x128xi32>
    %c-2073254261_i32_4 = arith.constant -2073254261 : i32
    %38 = vector.broadcast %c-2073254261_i32_4 : i32 to vector<8x128xi32>
    %39 = arith.muli %37, %38 : vector<8x128xi32>
    %c16_i32_5 = arith.constant 16 : i32
    %40 = vector.broadcast %c16_i32_5 : i32 to vector<8x128xi32>
    %41 = arith.shrui %39, %40 : vector<8x128xi32>
    %42 = arith.xori %39, %41 : vector<8x128xi32>
    %c8_i32 = arith.constant 8 : i32
    %43 = vector.broadcast %c8_i32 : i32 to vector<8x128xi32>
    %44 = arith.shrui %27, %43 : vector<8x128xi32>
    %45 = arith.uitofp %44 : vector<8x128xi32> to vector<8x128xf32>
    %cst = arith.constant 5.000000e-01 : f32
    %46 = vector.broadcast %cst : f32 to vector<8x128xf32>
    %47 = arith.addf %45, %46 : vector<8x128xf32>
    %cst_6 = arith.constant 5.96046448E-8 : f32
    %48 = vector.broadcast %cst_6 : f32 to vector<8x128xf32>
    %49 = arith.mulf %47, %48 : vector<8x128xf32>
    %c8_i32_7 = arith.constant 8 : i32
    %50 = vector.broadcast %c8_i32_7 : i32 to vector<8x128xi32>
    %51 = arith.shrui %42, %50 : vector<8x128xi32>
    %52 = arith.uitofp %51 : vector<8x128xi32> to vector<8x128xf32>
    %cst_8 = arith.constant 5.96046448E-8 : f32
    %53 = vector.broadcast %cst_8 : f32 to vector<8x128xf32>
    %54 = arith.mulf %52, %53 : vector<8x128xf32>
    %55 = math.log %49 : vector<8x128xf32>
    %cst_9 = arith.constant -2.000000e+00 : f32
    %56 = vector.broadcast %cst_9 : f32 to vector<8x128xf32>
    %57 = arith.mulf %56, %55 : vector<8x128xf32>
    %58 = math.sqrt %57 : vector<8x128xf32>
    %cst_10 = arith.constant 6.28318548 : f32
    %59 = vector.broadcast %cst_10 : f32 to vector<8x128xf32>
    %60 = arith.mulf %59, %54 : vector<8x128xf32>
    %61 = math.cos %60 : vector<8x128xf32>
    %62 = arith.mulf %58, %61 : vector<8x128xf32>
    %c0_11 = arith.constant 0 : index
    %c0_12 = arith.constant 0 : index
    %63 = vector.load %arg2[%c0_11, %c0_12] : memref<8x128xf32, #tpu.memory_space<vmem>>, vector<8x128xf32>
    %cst_13 = arith.constant 1.000000e-01 : f32
    %64 = vector.broadcast %cst_13 : f32 to vector<8x128xf32>
    %65 = arith.mulf %64, %62 : vector<8x128xf32>
    %66 = arith.addf %63, %65 : vector<8x128xf32>
    %c0_14 = arith.constant 0 : index
    %c0_15 = arith.constant 0 : index
    %67 = vector.load %arg3[%c0_14, %c0_15] : memref<8x128xf32, #tpu.memory_space<vmem>>, vector<8x128xf32>
    tpu.vector_store %arg3[%c0_14, %c0_15], %66 {strides = array<i32>} : memref<8x128xf32, #tpu.memory_space<vmem>>, vector<8x128xf32>,
    return
  }
  func.func @transform_0(%arg0: i32, %arg1: memref<1xi32, #tpu.memory_space<smem>>) -> (i32, i32) {
    %c0_i32 = arith.constant 0 : i32
    %c0_i32_0 = arith.constant 0 : i32
    return %arg0, %c0_i32 : i32, i32
  }
  func.func @transform_1(%arg0: i32, %arg1: memref<1xi32, #tpu.memory_space<smem>>) -> (i32, i32) {
    %c0_i32 = arith.constant 0 : i32
    %c0_i32_0 = arith.constant 0 : i32
    return %arg0, %c0_i32 : i32, i32
  }
}

</mosaic_0001>

<llo_original>
// kernel: gaussian_noise_pallas.1
$region0: #{gaussian_noise_pallas.1}
  #allocation0 [shape = 'u32[]', space=smem, size = 0x4, offset = 0x4, fixed_abs, tag = 'smem constant byte address 0x4 - core index']
  #allocation1 [shape = 'u32[72,128]{1,0:T(1,128)}', space=vmem, size = 0x9000, scoped, tag = 'internal scratch']
  #allocation2 [shape = 's32[1]{0}', space=sflag, size = 0x4, scoped, tag = 'scoped memory for gaussian_noise_pallas.1']
  #allocation3 [shape = 's32[1]{0:T(128)S(6)}', space=smem, size = 0x200, scoped, tag = 'prefetched SMEM operand 0']
  %s0 = inlined_call_operand.<no memory space> [shape: s32[1], index: 0, kind: input, shape index: {}]
  %s1 = inlined_call_operand.vmem [shape: f32[16,128], index: 1, kind: input, shape index: {}]
  %s2 = inlined_call_operand.vmem [shape: f32[16,128], index: 2, kind: output, shape index: {}]
  %s3 = sld [smem:[#allocation0]]
  $region37: #{gaussian_noise_pallas.1} parent=0
    _
  %s5 = ssub.s32 1, %s3
  %s6 = scalar_select 0, %s5, %s3
  %7 = sst [smem:[#allocation3]] %s0
  loop: start=0, step=1, limit=4
  $region2: #{gaussian_noise_pallas.1} parent=0 // loop_pre_header
    _
  $region3: #{gaussian_noise_pallas.1} parent=0 // loop_header
    %s9 = sphi 0, %s13
    %p10 = scmp.ge.s32.totalorder %s9, 4
    %s19 = sphi 0, %s21
    %s22 = sphi 0, %s19
    %s23 = sphi 0, %s22
    %s39 = sphi 0, %s23
    %s45 = sphi 0, %s47
    %s48 = sphi 0, %s45
    %s49 = sphi 0, %s48
    %s65 = sphi 0, %s49
  $region4: #{gaussian_noise_pallas.1} parent=0 // loop_header_branch
    %12 = sbr.rel (%p10) target = $region8
  $region5: #{gaussian_noise_pallas.1} parent=0 // loop_body
    %s14 = ssub.s32 %s9, 1
    %s15 = ssub.s32 %s9, 2
    %s16 = sadd.s32 %s9, 1
    %s17 = ssub.s32 %s9, %s16
    %p18 = scmp.eq.s32.totalorder %s17, 0
    %s20 = sadd.s32 %s19, 1
    %s21 = scalar_select %p18, %s19, %s20
    %p24 = pneg %p18
    %p25 = scmp.eq.s32.totalorder %s9, 1
    %p26 = por %p24, %p25
    %p27 = scmp.ne.s32.totalorder %s19, %s22
    %p28 = scmp.eq.s32.totalorder %s9, 0
    %p29 = por %p27, %p28
    %p30 = scmp.ne.s32.totalorder %s19, %s22
    %p31 = scmp.eq.s32.totalorder %s14, 1
    %p32 = por %p30, %p31
    %p33 = scmp.ne.s32.totalorder %s22, %s23
    %p34 = scmp.eq.s32.totalorder %s14, 0
    %p35 = por %p33, %p34
    %p36 = scmp.ne.s32.totalorder %s22, %s23
    %p37 = scmp.eq.s32.totalorder %s15, 1
    %p38 = por %p36, %p37
    %p40 = scmp.ne.s32.totalorder %s23, %s39
    %p41 = scmp.eq.s32.totalorder %s15, 0
    %p42 = por %p40, %p41
    %s43 = ssub.s32 %s9, %s16
    %p44 = scmp.eq.s32.totalorder %s43, 0
    %s46 = sadd.s32 %s45, 1
    %s47 = scalar_select %p44, %s45, %s46
    %p50 = pneg %p44
    %p51 = scmp.eq.s32.totalorder %s9, 1
    %p52 = por %p50, %p51
    %p53 = scmp.ne.s32.totalorder %s45, %s48
    %p54 = scmp.eq.s32.totalorder %s9, 0
    %p55 = por %p53, %p54
    %p56 = scmp.ne.s32.totalorder %s45, %s48
    %p57 = scmp.eq.s32.totalorder %s14, 1
    %p58 = por %p56, %p57
    %p59 = scmp.ne.s32.totalorder %s48, %s49
    %p60 = scmp.eq.s32.totalorder %s14, 0
    %p61 = por %p59, %p60
    %p62 = scmp.ne.s32.totalorder %s48, %s49
    %p63 = scmp.eq.s32.totalorder %s15, 1
    %p64 = por %p62, %p63
    %p66 = scmp.ne.s32.totalorder %s49, %s65
    %p67 = scmp.eq.s32.totalorder %s15, 0
    %p68 = por %p66, %p67
    %p69 = scmp.le.s32.totalorder 1, %s9
    %p70 = scmp.lt.s32.totalorder %s9, 3
    %p71 = pnand %p69, %p70
    %p72 = pneg %p71
    // Predicated region
    $region9: #{gaussian_noise_pallas.1} parent=5 // pred_check
      _
    $region10: #{gaussian_noise_pallas.1} parent=5 // pred_check_branch
      %74 = sbr.rel (%p71) target = $region12
    $region11: #{gaussian_noise_pallas.1} parent=5 // pred_region
      %s75 = ssub.s32 %s9, 1
    $region12: #{gaussian_noise_pallas.1} parent=5 // pred_fallthru
      _
    %p76 = scmp.lt.s32.totalorder %s9, 2
    // Predicated region
    $region13: #{gaussian_noise_pallas.1} parent=5 // pred_check
      %p77 = pneg %p76
    $region14: #{gaussian_noise_pallas.1} parent=5 // pred_check_branch
      %79 = sbr.rel (%p77) target = $region16
    $region15: #{gaussian_noise_pallas.1} parent=5 // pred_region
      // Predicated region
      $region17: #{gaussian_noise_pallas.1} parent=15 // pred_check
        %p80 = pneg %p29
      $region18: #{gaussian_noise_pallas.1} parent=15 // pred_check_branch
        %82 = sbr.rel (%p80) target = $region20
      $region19: #{gaussian_noise_pallas.1} parent=15 // pred_region
        %p83 = scmp.lt.s32.totalorder %s9, 1
        %s84 = scalar_select %p83, %s9, 1
        %s85 = smul.addr %s84, 8
        %s86 = scalar_lea.vmem %s1, %s85
      $region20: #{gaussian_noise_pallas.1} parent=15 // pred_fallthru
        _
    $region16: #{gaussian_noise_pallas.1} parent=5 // pred_fallthru
      _
    %p87 = scmp.le.s32.totalorder 1, %s9
    %p88 = scmp.lt.s32.totalorder %s9, 3
    %p89 = pnand %p87, %p88
    %p90 = pneg %p89
    // Predicated region
    $region21: #{gaussian_noise_pallas.1} parent=5 // pred_check
      _
    $region22: #{gaussian_noise_pallas.1} parent=5 // pred_check_branch
      %92 = sbr.rel (%p89) target = $region24
    $region23: #{gaussian_noise_pallas.1} parent=5 // pred_region
      %s93 = ssub.s32 %s9, 1
      %p94 = scmp.lt.s32.totalorder %s14, 1
      %s95 = scalar_select %p94, %s14, 1
      %s96 = smul.addr %s95, 8
      %s97 = scalar_lea.vmem %s1, %s96
      %p98 = pneg %p35
      %p99 = pneg %p32
      %p100 = pneg %p61
      %p101 = pneg %p58
      %p102 = scmp.lt.s32.totalorder %s14, 1
      %s103 = scalar_select %p102, %s14, 1
      %s104 = smul.addr %s103, 8
      %s105 = scalar_lea.vmem %s2, %s104
      %p106 = scmp.lt.s32.totalorder %s14, 1
      %s107 = scalar_select %p106, %s14, 1
      %s108 = smul.addr %s107, 8
      %s109 = scalar_lea.vmem %s1, %s108
      %p110 = scmp.lt.s32.totalorder %s14, 1
      %s111 = scalar_select %p110, %s14, 1
      %s112 = smul.addr %s111, 8
      %s113 = scalar_lea.vmem %s2, %s112
      %s114 = sld [smem:[#allocation3]]
      %v115 = vlaneseq
      %v116 = vshrl.u32 %v115, 7
      %v117 = vlaneseq
      %v118 = vand.u32 %v117, 127
      %s119 = smul.u32 %s114, 2654435769
      %s120 = smul.u32 %s14, 2246822507
      %s121 = sxor.u32 %s119, %s120
      %v122 = vmul.u32 %v116, 3266489909
      %v123 = vstv %s121
      %v124 = vxor.u32 %v123, %v122
      %v125 = vmul.u32 %v118, 668265263
      %v126 = vxor.u32 %v124, %v125
      %v127 = vxor.u32 %v126, 1757159915
      %v128 = vshrl.u32 %v127, 16
      %v129 = vxor.u32 %v127, %v128
      %v130 = vmul.u32 %v129, 2146121005
      %v131 = vshrl.u32 %v130, 15
      %v132 = vxor.u32 %v130, %v131
      %v133 = vmul.u32 %v132, 2221713035
      %v134 = vshrl.u32 %v133, 16
      %v135 = vxor.u32 %v133, %v134
      %v136 = vxor.u32 %v126, 48610963
      %v137 = vshrl.u32 %v136, 16
      %v138 = vxor.u32 %v136, %v137
      %v139 = vmul.u32 %v138, 2146121005
      %v140 = vshrl.u32 %v139, 15
      %v141 = vxor.u32 %v139, %v140
      %v142 = vmul.u32 %v141, 2221713035
      %v143 = vshrl.u32 %v142, 16
      %v144 = vxor.u32 %v142, %v143
      %v145 = vshrl.u32 %v135, 8
      %v146 = vshrl.u32 %v145, 16
      %v147 = vand.u32 %v145, 65535
      %v148 = vcvt.s32.f32 %v146
      %v149 = vmul.f32 %v148, 65536.0
      %v150 = vcvt.s32.f32 %v147
      %v151 = vadd.f32 %v149, %v150
      %v152 = vadd.f32 %v151, 0.5
      %v153 = vmul.f32 %v152, 5.9604645e-08
      %v154 = vshrl.u32 %v144, 8
      %v155 = vshrl.u32 %v154, 16
      %v156 = vand.u32 %v154, 65535
      %v157 = vcvt.s32.f32 %v155
      %v158 = vmul.f32 %v157, 65536.0
      %v159 = vcvt.s32.f32 %v156
      %v160 = vadd.f32 %v158, %v159
      %v161 = vmul.f32 %v160, 5.9604645e-08
      %v162 = vlog2.pop %v153
      %v163 = vmul.f32 %v162, 0.6931472
      %v164 = vmul.f32 %v163, -2.0
      %v165 = vrsqrt.pop %v164
      %v166 = vmul.f32 %v165, %v164
      %v167 = vmul.f32 %v166, %v165
      %v168 = vmul.f32 0.5, %v167
      %v169 = vsub.f32 1.5, %v168
      %v170 = vmul.f32 %v165, %v169
      %v171 = vmul.f32 %v164, %v170
      %vm172 = vcmp.eq.f32.partialorder %v164, inf
      %v173 = vsel %vm172, %v164, %v171
      %vm174 = vcmp.eq.f32.partialorder %v164, 0.0
      %v175 = vand.u32 %v164, 2147483648
      %v176 = vsel %vm174, %v175, %v173
      %v177 = vmul.f32 %v161, 6.2831855
      %v178 = vand.u32 2147483647, %v177
      %vm179 = vcmp.le.f32.partialorder %v178, 0.7853982
      %vm180 = vcmp.lt.s32.totalorder %v177, 0
      %v181 = vand.u32 %v177, 2139095040
      %v182 = vshrl.u32 %v181, 23
      %v183 = vsub.s32 %v182, 127
      %v184 = vand.u32 2147483647, %v177
      %v185 = vand.u32 %v184, 8388607
      %v186 = vor.u32 %v185, 8388608
      %v187 = vsub.s32 0, %v186
      %v188 = vadd.s32 %v183, 1
      %vm189 = vcmp.gt.s32.totalorder %v188, 0
      %v190 = vsel %vm189, %v188, 0
      %v191 = vshrl.u32 %v190, 5
      %v192 = vand.u32 %v190, 31
      %v193 = vsub.s32 32, %v192
      %v194 = vshrl.u32 683565275, %v193
      %v195 = vshll.u32 683565275, %v192
      %v196 = vshrl.u32 2475754826, %v193
      %v197 = vor.u32 %v195, %v196
      %v198 = vshll.u32 2475754826, %v192
      %v199 = vshrl.u32 2131351028, %v193
      %v200 = vor.u32 %v198, %v199
      %v201 = vshll.u32 2131351028, %v192
      %v202 = vshrl.u32 2102212464, %v193
      %v203 = vor.u32 %v201, %v202
      %v204 = vshll.u32 2102212464, %v192
      %v205 = vshrl.u32 920167782, %v193
      %v206 = vor.u32 %v204, %v205
      %v207 = vshll.u32 920167782, %v192
      %v208 = vshrl.u32 1326507024, %v193
      %v209 = vor.u32 %v207, %v208
      %vm210 = vcmp.lt.s32.totalorder %v191, 1
      %vm211 = vcmp.lt.s32.totalorder %v191, 2
      %vm212 = vcmp.lt.s32.totalorder %v191, 3
      %vm213 = vcmp.lt.s32.totalorder %v191, 4
      %v214 = vsel %vm210, %v194, %v197
      %v215 = vsel %vm213, %v203, 2102212464
      %v216 = vsel %vm212, %v200, %v215
      %v217 = vsel %vm211, %v214, %v216
      %v218 = vsel %vm210, %v197, %v200
      %v219 = vsel %vm213, %v206, 920167782
      %v220 = vsel %vm212, %v203, %v219
      %v221 = vsel %vm211, %v218, %v220
      %v222 = vsel %vm210, %v200, %v203
      %v223 = vsel %vm213, %v209, 1326507024
      %v224 = vsel %vm212, %v206, %v223
      %v225 = vsel %vm211, %v222, %v224
      %v226 = vshll.u32 %v186, 8
      %v227 = vand.u32 %v226, 65535
      %v228 = vshrl.u32 %v226, 16
      %v229 = vand.u32 %v225, 65535
      %v230 = vshrl.u32 %v225, 16
      %v231 = vmul.u32 %v227, %v229
      %v232 = vmul.u32 %v227, %v230
      %v233 = vmul.u32 %v228, %v229
      %v234 = vmul.u32 %v228, %v230
      %v235 = vshll.u32 %v232, 16
      %v236 = vshrl.u32 %v232, 16
      %v237 = vshll.u32 %v233, 16
      %v238 = vshrl.u32 %v233, 16
      %vm239 = vc.u32 %v231, %v235
      %v240 = vsel %vm239, 1, 0
      %v241 = vadd.s32 %v231, %v235
      %v242 = vadd.s32 %v234, %v240
      %vm243 = vc.u32 %v241, %v237
      %v244 = vsel %vm243, 1, 0
      %v245 = vadd.s32 %v241, %v237
      %v246 = vadd.s32 %v242, %v244
      %v247 = vadd.s32 %v246, %v236
      %v248 = vadd.s32 %v247, %v238
      %v249 = vand.u32 %v226, 65535
      %v250 = vshrl.u32 %v226, 16
      %v251 = vand.u32 %v221, 65535
      %v252 = vshrl.u32 %v221, 16
      %v253 = vmul.u32 %v249, %v251
      %v254 = vmul.u32 %v249, %v252
      %v255 = vmul.u32 %v250, %v251
      %v256 = vmul.u32 %v250, %v252
      %v257 = vshll.u32 %v254, 16
      %v258 = vshrl.u32 %v254, 16
      %v259 = vshll.u32 %v255, 16
      %v260 = vshrl.u32 %v255, 16
      %vm261 = vc.u32 %v253, %v257
      %v262 = vsel %vm261, 1, 0
      %v263 = vadd.s32 %v253, %v257
      %v264 = vadd.s32 %v256, %v262
      %vm265 = vc.u32 %v263, %v259
      %v266 = vsel %vm265, 1, 0
      %v267 = vadd.s32 %v263, %v259
      %v268 = vadd.s32 %v264, %v266
      %v269 = vadd.s32 %v268, %v258
      %v270 = vadd.s32 %v269, %v260
      %v271 = vmul.u32 %v226, %v217
      %v272 = vadd.s32 %v248, %v267
      %vm273 = vc.u32 %v248, %v267
      %v274 = vadd.s32 %v270, 1
      %v275 = vsel %vm273, %v274, %v270
      %v276 = vadd.s32 %v271, %v275
      %v277 = vadd.s32 %v276, 536870912
      %v278 = vshrl.u32 %v277, 30
      %v279 = vshll.u32 %v278, 30
      %v280 = vsub.s32 %v276, %v279
      %vm281 = vcmp.lt.s32.totalorder %v280, 0
      %v282 = vsub.s32 0, %v280
      %v283 = vsel %vm281, %v282, %v280
      %v284 = vclz %v283
      %v285 = vsub.s32 %v284, 2
      %vm286 = vcmp.gt.s32.totalorder 0, %v285
      %v287 = vsel %vm286, 0, %v285
      %v288 = vsub.s32 32, %v287
      %v289 = vshll.u32 %v280, %v287
      %v290 = vshrl.u32 %v272, %v288
      %v291 = vor.u32 %v289, %v290
      %v292 = vsub.s32 4294967266, %v287
      %v293 = vadd.s32 %v292, 127
      %v294 = vshll.u32 %v293, 23
      %v295 = vor.u32 4788187, %v294
      %v296 = vand.u32 2147483647, %v295
      %v298 = vcvt.s32.f32 %v291
      %v299 = vmul.f32 %v298, %v296
      %v300 = vxor.u32 %v299, 2147483648
      %v301 = vsel %vm180, %v300, %v299
      %v302 = vsub.s32 4, %v278
      %v303 = vsel %vm180, %v302, %v278
      %v304 = vsel %vm179, %v177, %v301
      %v305 = vsel %vm179, 0, %v303
      %v306 = vmul.f32 %v304, %v304
      %v307 = vmul.f32 %v306, -0.001358992
      %v308 = vadd.f32 %v307, 0.041655596
      %v309 = vmul.f32 %v306, %v308
      %v310 = vadd.f32 %v309, -0.4999988
      %v311 = vmul.f32 %v306, %v310
      %v312 = vadd.f32 1.0, %v311
      %v313 = vmul.f32 %v304, %v304
      %v314 = vmul.f32 %v313, -0.00019511016
      %v315 = vadd.f32 %v314, 0.008332121
      %v316 = vmul.f32 %v313, %v315
      %v317 = vadd.f32 %v316, -0.16666654
      %v318 = vmul.f32 %v313, %v317
      %v319 = vadd.f32 %v318, 1.0
      %v320 = vmul.f32 %v319, %v304
      %vm321 = vweird.f32 %v177
      %v322 = vand.u32 %v305, 3
      %vm323 = vcmp.lt.s32.totalorder %v322, 2
      %vm324 = vcmp.eq.s32.totalorder %v322, 0
      %v325 = vxor.u32 %v320, 2147483648
      %v326 = vsel %vm324, %v312, %v325
      %vm327 = vcmp.eq.s32.totalorder %v322, 2
      %v328 = vxor.u32 %v312, 2147483648
      %v329 = vsel %vm327, %v328, %v320
      %v330 = vsel %vm323, %v326, %v329
      %v331 = vsel %vm321, nan, %v330
      %v332 = vmul.f32 %v176, %v331
      %v333 = vld [vmem:[%s109] sm:$0xff]
      %v334 = vmul.f32 %v332, 0.1
      %v335 = vadd.f32 %v333, %v334
      %336 = vst [vmem:[%s113] sm:$0xff] %v335
      %p337 = scmp.lt.s32.totalorder %s14, 1
      %s338 = scalar_select %p337, %s14, 1
      %s339 = smul.addr %s338, 8
      %s340 = scalar_lea.vmem %s2, %s339
      // Predicated region
      $region25: #{gaussian_noise_pallas.1} parent=23 // pred_check
        %p341 = pneg %p58
      $region26: #{gaussian_noise_pallas.1} parent=23 // pred_check_branch
        %343 = sbr.rel (%p341) target = $region28
      $region27: #{gaussian_noise_pallas.1} parent=23 // pred_region
        _
      $region28: #{gaussian_noise_pallas.1} parent=23 // pred_fallthru
        _
    $region24: #{gaussian_noise_pallas.1} parent=5 // pred_fallthru
      _
    %p344 = scmp.le.s32.totalorder 2, %s9
    // Predicated region
    $region29: #{gaussian_noise_pallas.1} parent=5 // pred_check
      %p345 = pneg %p344
    $region30: #{gaussian_noise_pallas.1} parent=5 // pred_check_branch
      %347 = sbr.rel (%p345) target = $region32
    $region31: #{gaussian_noise_pallas.1} parent=5 // pred_region
      %s348 = ssub.s32 %s9, 2
      // Predicated region
      $region33: #{gaussian_noise_pallas.1} parent=31 // pred_check
        %p349 = pneg %p64
      $region34: #{gaussian_noise_pallas.1} parent=31 // pred_check_branch
        %351 = sbr.rel (%p349) target = $region36
      $region35: #{gaussian_noise_pallas.1} parent=31 // pred_region
        %p352 = scmp.lt.s32.totalorder %s15, 1
        %s353 = scalar_select %p352, %s15, 1
        %s354 = smul.addr %s353, 8
        %s355 = scalar_lea.vmem %s2, %s354
      $region36: #{gaussian_noise_pallas.1} parent=31 // pred_fallthru
        _
    $region32: #{gaussian_noise_pallas.1} parent=5 // pred_fallthru
      _
  $region6: #{gaussian_noise_pallas.1} parent=0 // loop_footer
    %s13 = sadd.s32 1, %s9
  $region7: #{gaussian_noise_pallas.1} parent=0 // loop_footer_branch
    %8 = sbr.rel target = $region3
  $region8: #{gaussian_noise_pallas.1} parent=0 // loop_exit
    _

</llo_original>
